<compile_context>
chip_gen: v5e
topology: v5e:2x2
jax: 0.10.0
libtpu: 0.0.40
codegen_flags: <defaults>
</compile_context>

<pallas_src>
import jax
import jax.numpy as jnp
from jax.experimental import pallas as pl
from jax.experimental.pallas import tpu as pltpu


def _round_up(n: int, m: int) -> int:
    return ((n + m - 1) // m) * m


def _vmem_budget_bytes() -> int:
    """~75% of physical VMEM (v7x: ~48 MiB, v5e/v6e: ~96 MiB); 32 MiB floor."""
    try:
        phys = int(pltpu.get_tpu_info().vmem_capacity_bytes)
    except Exception:
        phys = 64 * 1024 * 1024  # conservative: v7x has the smallest VMEM
    return max(32 * 1024 * 1024, (phys * 3) // 4)


def _step_vmem_bytes(tm: int, tn: int, i_pad: int) -> int:
    """Rough per-step VMEM footprint with default double-buffering."""
    return (2 * tm * i_pad * 4      # x tile (f32), double-buffered
            + 2 * i_pad * tn * 2    # W^2.T tile (bf16), double-buffered
            + 2 * 2 * tn * 4        # inv_mean + bias tiles (f32)
            + 2 * tm * tn * 4       # output tile (f32), double-buffered
            + tm * i_pad * 2)       # log_x scratch (bf16), single


def _pick_tile(dim: int, granule: int, cap: int):
    """Largest tile (multiple of granule, <= cap) dividing the padded dim.

    Keeps trailing padding under one granule; falls back to a full-width tile
    when the divisor-based choice degenerates (e.g. prime unit counts).
    """
    padded = _round_up(dim, granule)
    units = padded // granule
    cap_units = max(1, cap // granule)
    best = 1
    for d in range(1, min(units, cap_units) + 1):
        if units % d == 0:
            best = d
    tile = best * granule
    if 2 * tile <= cap and dim > cap:
        tile = cap
        padded = _round_up(dim, tile)
    return tile, padded


def _spu_kernel(x_ref, wt_ref, inv_mean_ref, b_ref, o_ref, logx_ref):
    """Grid = (batch_tiles, output_tiles); output axis is the innermost.

    x_ref        : (tm, I_pad)  f32   input tile (constant along inner axis)
    wt_ref       : (I_pad, tn)  bf16  W**2 transposed, streamed per output tile
    inv_mean_ref : (1, tn)      f32   1 / mean(W**2) per output column
    b_ref        : (1, tn)      f32   bias per output column
    o_ref        : (tm, tn)     f32   output tile
    logx_ref     : (tm, I_pad)  bf16  VMEM scratch: hoisted log(x + 1)
    """
    # Hoist log(x+1): recompute only when a new batch tile starts.  The batch
    # tile is VMEM-resident across the whole inner output-tile sweep, so the
    # EUP log work and the x HBM stream are paid once per batch tile.
    @pl.when(pl.program_id(1) == 0)
    def _():
        logx_ref[...] = jnp.log(x_ref[...] + 1.0).astype(logx_ref.dtype)

    # Canonical (M,K)x(K,N) bf16 matmul with f32 accumulation on the MXU.
    act = jax.lax.dot_general(
        logx_ref[...],
        wt_ref[...],
        dimension_numbers=(((1,), (0,)), ((), ())),
        preferred_element_type=jnp.float32,
    )
    # Divide-after-matmul (as a broadcast multiply by the precomputed
    # reciprocal of the mean), matching the reference ordering.
    o_ref[...] = jnp.exp(act * inv_mean_ref[...] + b_ref[...])


def smooth_product_unit(x, weights, biases, *, tm_max=512, tn_max=512):
    """x: (B, I), weights: (O, I), biases: (O,) -> (B, O) float32."""
    B, I = x.shape
    O, I_w = weights.shape
    assert I_w == I, "weights must be (output_dim, input_dim)"
    assert biases.shape == (O,), "biases must be (output_dim,)"

    I_pad = _round_up(I, 128)  # contraction dim, un-tiled (see TODO for K-tiling)

    # ---- generation-aware tile caps, then pad-minimizing tile selection ----
    budget = _vmem_budget_bytes()
    tm_cap = max(8, (min(tm_max, _round_up(B, 8)) // 8) * 8)
    tn_cap = max(128, (min(tn_max, _round_up(O, 128)) // 128) * 128)
    while (_step_vmem_bytes(tm_cap, tn_cap, I_pad) > budget
           and (tm_cap > 8 or tn_cap > 128)):
        x_bytes = tm_cap * I_pad * (2 * 4 + 2)   # x blocks + log_x scratch
        w_bytes = tn_cap * I_pad * (2 * 2)       # weight blocks
        if (x_bytes >= w_bytes and tm_cap > 8) or tn_cap <= 128:
            tm_cap = max(8, ((tm_cap // 2) // 8) * 8)
        else:
            tn_cap = max(128, ((tn_cap // 2) // 128) * 128)

    tm, B_pad = _pick_tile(B, 8, tm_cap)
    tn, O_pad = _pick_tile(O, 128, tn_cap)

    # ---- wrapper-side weight prep (one-time O(O*I) work) and padding ----
    xf = x if x.dtype == jnp.float32 else x.astype(jnp.float32)
    wf = weights if weights.dtype == jnp.float32 else weights.astype(jnp.float32)
    bf = biases if biases.dtype == jnp.float32 else biases.astype(jnp.float32)

    w_sq = wf * wf                                   # (O, I) f32
    mean_sq = jnp.mean(w_sq, axis=1)                 # (O,)   matches reference
    inv_mean = 1.0 / mean_sq                         # inf/NaN propagate like the ref divide
    wt = w_sq.T.astype(jnp.bfloat16)                 # (I, O) bf16 MXU operand

    if (B_pad, I_pad) != (B, I):
        x_p = jnp.pad(xf, ((0, B_pad - B), (0, I_pad - I)))
    else:
        x_p = xf
    if (I_pad, O_pad) != (I, O):
        wt_p = jnp.pad(wt, ((0, I_pad - I), (0, O_pad - O)))
    else:
        wt_p = wt
    inv_2d = inv_mean.reshape(1, O)
    b_2d = bf.reshape(1, O)
    if O_pad != O:
        # Padded output columns get inv_mean = 0 and bias = 0 -> exp(0) = 1,
        # sliced away below (keeps NaNs out of the dead lanes).
        inv_p = jnp.pad(inv_2d, ((0, 0), (0, O_pad - O)))
        b_p = jnp.pad(b_2d, ((0, 0), (0, O_pad - O)))
    else:
        inv_p = inv_2d
        b_p = b_2d

    grid = (B_pad // tm, O_pad // tn)  # batch tiles outer, output tiles inner

    out_p = pl.pallas_call(
        _spu_kernel,
        out_shape=jax.ShapeDtypeStruct((B_pad, O_pad), jnp.float32),
        grid_spec=pltpu.PrefetchScalarGridSpec(
            num_scalar_prefetch=0,
            grid=grid,
            in_specs=[
                pl.BlockSpec((tm, I_pad), lambda i, j: (i, 0)),    # x: batch tile
                pl.BlockSpec((I_pad, tn), lambda i, j: (0, j)),    # W^2.T: out tile
                pl.BlockSpec((1, tn), lambda i, j: (0, j)),        # 1/mean(W^2)
                pl.BlockSpec((1, tn), lambda i, j: (0, j)),        # bias
            ],
            out_specs=pl.BlockSpec((tm, tn), lambda i, j: (i, j)),
            scratch_shapes=[pltpu.VMEM((tm, I_pad), jnp.bfloat16)],  # hoisted log(x+1)
        ),
        compiler_params=pltpu.CompilerParams(
            # Batch tiles are independent -> megacore-shardable on v7x; the
            # inner output-tile axis carries the log_x scratch reuse, so it
            # must stay sequential ("arbitrary").
            dimension_semantics=("parallel", "arbitrary"),
            vmem_limit_bytes=int(budget),
        ),
    )(x_p, wt_p, inv_p, b_p)

    return out_p[:B, :O]


def _reference(x, weights, biases):
    log_x = jnp.log(x + 1.0)
    w_sq = weights ** 2
    mos = w_sq.mean(axis=1)
    act = jnp.matmul(log_x, w_sq.T, precision=jax.lax.Precision.HIGHEST)
    act = act / mos[None, :]
    return jnp.exp(act + biases[None, :])


if __name__ == "__main__":
    key = jax.random.PRNGKey(0)
    k_x, k_w, k_b = jax.random.split(key, 3)

    # Shapes that exercise the flipped (batch, output-tile) grid, the log(x+1)
    # hoist (3 inner output tiles per batch tile), lane-density padding
    # (I, O not multiples of 128), and an even parallel axis (2 batch tiles).
    batch, input_dim, output_dim = 256, 96, 320

    weights = jax.random.normal(k_w, (output_dim, input_dim), dtype=jnp.float32)
    biases = jax.random.normal(k_b, (output_dim,), dtype=jnp.float32)
    # Module assumes x > -1; scale keeps exp(activation) well inside f32 range.
    x = 0.05 * jnp.abs(jax.random.normal(k_x, (batch, input_dim), dtype=jnp.float32))

    out = smooth_product_unit(x, weights, biases, tm_max=128, tn_max=128)
    out = jax.block_until_ready(out)

    ref = _reference(x, weights, biases)
    assert out.shape == (batch, output_dim)
    # Tolerance budget for bf16 MXU operands (f32 accumulation) plus exp()
    # amplification of matmul rounding differences vs. the f32 reference.
    assert bool(jnp.allclose(out, ref, rtol=2e-2, atol=1e-3)), "mismatch vs reference"

    print("KERNEL_OK")
</pallas_src>

<mosaic_0001>
module attributes {stable_mosaic.version = 11 : i64} {
  func.func @_spu_kernel(%arg0: i32, %arg1: i32, %arg2: memref<128x128xf32, #tpu.memory_space<vmem>>, %arg3: memref<128x128xbf16, #tpu.memory_space<vmem>>, %arg4: memref<1x128xf32, #tpu.memory_space<vmem>>, %arg5: memref<1x128xf32, #tpu.memory_space<vmem>>, %arg6: memref<128x128xf32, #tpu.memory_space<vmem>>, %arg7: memref<128x128xbf16, #tpu.memory_space<vmem>>) attributes {dimension_semantics = [#tpu.dimension_semantics<parallel>, #tpu.dimension_semantics<arbitrary>], iteration_bounds = array<i64: 2, 3>, scalar_prefetch = 0 : i64, scratch_operands = 1 : i64, tpu.core_type = #tpu.core_type<tc>, window_params = [{transform_indices = @transform_0, window_bounds = array<i64: 128, 128>}, {transform_indices = @transform_1, window_bounds = array<i64: 128, 128>}, {transform_indices = @transform_2, window_bounds = array<i64: 1, 128>}, {transform_indices = @transform_3, window_bounds = array<i64: 1, 128>}, {transform_indices = @transform_4, window_bounds = array<i64: 128, 128>}]} {
    %c0_i32 = arith.constant 0 : i32
    %0 = arith.cmpi eq, %arg1, %c0_i32 : i32
    %1 = arith.extui %0 : i1 to i32
    %c0_i32_0 = arith.constant 0 : i32
    %2 = arith.cmpi ne, %1, %c0_i32_0 : i32
    scf.if %2 {
      %c0_10 = arith.constant 0 : index
      %c0_11 = arith.constant 0 : index
      %14 = vector.load %arg2[%c0_10, %c0_11] : memref<128x128xf32, #tpu.memory_space<vmem>>, vector<128x128xf32>
      %cst_12 = arith.constant 1.000000e+00 : f32
      %15 = vector.broadcast %cst_12 : f32 to vector<128x128xf32>
      %16 = arith.addf %14, %15 : vector<128x128xf32>
      %17 = math.log %16 : vector<128x128xf32>
      %18 = arith.truncf %17 : vector<128x128xf32> to vector<128x128xbf16>
      %c0_13 = arith.constant 0 : index
      %c0_14 = arith.constant 0 : index
      %19 = vector.load %arg7[%c0_13, %c0_14] : memref<128x128xbf16, #tpu.memory_space<vmem>>, vector<128x128xbf16>
      tpu.vector_store %arg7[%c0_13, %c0_14], %18 {strides = array<i32>} : memref<128x128xbf16, #tpu.memory_space<vmem>>, vector<128x128xbf16>,
    } else {
    }
    %c0 = arith.constant 0 : index
    %c0_1 = arith.constant 0 : index
    %3 = vector.load %arg7[%c0, %c0_1] : memref<128x128xbf16, #tpu.memory_space<vmem>>, vector<128x128xbf16>
    %c0_2 = arith.constant 0 : index
    %c0_3 = arith.constant 0 : index
    %4 = vector.load %arg3[%c0_2, %c0_3] : memref<128x128xbf16, #tpu.memory_space<vmem>>, vector<128x128xbf16>
    %cst = arith.constant dense<0.000000e+00> : vector<128x128xf32>
    %5 = tpu.matmul %3, %4, %cst {dimension_numbers = #tpu.dot_dimension_numbers<[1], [0], [0], [1], [0, 0, 1, 1], [], []>} : vector<128x128xbf16>, vector<128x128xbf16>, vector<128x128xf32> -> vector<128x128xf32>
    %c0_4 = arith.constant 0 : index
    %c0_5 = arith.constant 0 : index
    %6 = vector.load %arg4[%c0_4, %c0_5] : memref<1x128xf32, #tpu.memory_space<vmem>>, vector<1x128xf32>
    %7 = vector.broadcast %6 : vector<1x128xf32> to vector<128x128xf32>
    %8 = arith.mulf %5, %7 : vector<128x128xf32>
    %c0_6 = arith.constant 0 : index
    %c0_7 = arith.constant 0 : index
    %9 = vector.load %arg5[%c0_6, %c0_7] : memref<1x128xf32, #tpu.memory_space<vmem>>, vector<1x128xf32>
    %10 = vector.broadcast %9 : vector<1x128xf32> to vector<128x128xf32>
    %11 = arith.addf %8, %10 : vector<128x128xf32>
    %12 = math.exp %11 : vector<128x128xf32>
    %c0_8 = arith.constant 0 : index
    %c0_9 = arith.constant 0 : index
    %13 = vector.load %arg6[%c0_8, %c0_9] : memref<128x128xf32, #tpu.memory_space<vmem>>, vector<128x128xf32>
    tpu.vector_store %arg6[%c0_8, %c0_9], %12 {strides = array<i32>} : memref<128x128xf32, #tpu.memory_space<vmem>>, vector<128x128xf32>,
    return
  }
  func.func @transform_0(%arg0: i32, %arg1: i32) -> (i32, i32) {
    %c0_i32 = arith.constant 0 : i32
    %c0_i32_0 = arith.constant 0 : i32
    return %arg0, %c0_i32 : i32, i32
  }
  func.func @transform_1(%arg0: i32, %arg1: i32) -> (i32, i32) {
    %c0_i32 = arith.constant 0 : i32
    %c0_i32_0 = arith.constant 0 : i32
    return %c0_i32, %arg1 : i32, i32
  }
  func.func @transform_2(%arg0: i32, %arg1: i32) -> (i32, i32) {
    %c0_i32 = arith.constant 0 : i32
    %c0_i32_0 = arith.constant 0 : i32
    return %c0_i32, %arg1 : i32, i32
  }
  func.func @transform_3(%arg0: i32, %arg1: i32) -> (i32, i32) {
    %c0_i32 = arith.constant 0 : i32
    %c0_i32_0 = arith.constant 0 : i32
    return %c0_i32, %arg1 : i32, i32
  }
  func.func @transform_4(%arg0: i32, %arg1: i32) -> (i32, i32) {
    %c0_i32 = arith.constant 0 : i32
    return %arg0, %arg1 : i32, i32
  }
}

</mosaic_0001>

<llo_original>
// kernel: tpu_custom_call.1
$region0: #{tpu_custom_call.1}
  #allocation0 [shape = 'u32[]', space=smem, size = 0x4, offset = 0x4, fixed_abs, tag = 'smem constant byte address 0x4 - core index']
  #allocation1 [shape = 'u32[72,128]{1,0:T(1,128)}', space=vmem, size = 0x9000, scoped, tag = 'internal scratch']
  #allocation2 [shape = 'bf16[128,128]{1,0:T(8,128)(2,1)}', space=vmem, size = 0x8000, scoped, tag = 'scratch operand']
  %s0 = inlined_call_operand.hbm [shape: f32[256,128], index: 0, kind: input, shape index: {}]
  %s1 = inlined_call_operand.hbm [shape: bf16[128,384], index: 1, kind: input, shape index: {}]
  %s2 = inlined_call_operand.hbm [shape: f32[1,384], index: 2, kind: input, shape index: {}]
  %s3 = inlined_call_operand.hbm [shape: f32[1,384], index: 3, kind: input, shape index: {}]
  %s4 = inlined_call_operand.hbm [shape: f32[256,384], index: 4, kind: output, shape index: {}]
  %s5 = sld [smem:[#allocation0]]
  $region69: #{tpu_custom_call.1} parent=0
    _
  %s7 = ssub.s32 1, %s5
  %s8 = scalar_select 0, %s7, %s5
  $region1: #{tpu_custom_call.1} parent=0
    #allocation3 [shape = 'u8[131072]{0}', space=vmem, size = 0x20000, scoped, tag = 'input window, operand 0']
    #allocation4 [shape = 's32[2]{0}', space=sflag, size = 0x8, scoped, tag = 'scoped memory for tpu_custom_call.1']
    #allocation5 [shape = 's32[2]{0}', space=sflag, size = 0x8, scoped, tag = 'scoped memory for tpu_custom_call.1']
    #allocation6 [shape = 'u8[65536]{0}', space=vmem, size = 0x10000, scoped, tag = 'input window, operand 1']
    #allocation7 [shape = 's32[2]{0}', space=sflag, size = 0x8, scoped, tag = 'scoped memory for tpu_custom_call.1']
    #allocation8 [shape = 'u8[1024]{0}', space=vmem, size = 0x400, scoped, tag = 'input window, operand 2']
    #allocation9 [shape = 'u8[1024]{0}', space=vmem, size = 0x400, scoped, tag = 'input window, operand 3']
    #allocation10 [shape = 's32[2]{0}', space=sflag, size = 0x8, scoped, tag = 'scoped memory for tpu_custom_call.1']
    #allocation11 [shape = 'u8[131072]{0}', space=vmem, size = 0x20000, scoped, tag = 'output window, operand 0']
    %9 = vsyncpa [#allocation4], 0
    %s10 = scalar_lea.sflag [#allocation4], 1
    %11 = vsyncpa %s10, 0
    %12 = vsyncpa [#allocation7], 0
    %s13 = scalar_lea.sflag [#allocation7], 1
    %14 = vsyncpa %s13, 0
    %15 = vsyncpa [#allocation10], 0
    %s16 = scalar_lea.sflag [#allocation10], 1
    %17 = vsyncpa %s16, 0
    %18 = vsyncpa [#allocation5], 0
    %s19 = scalar_lea.sflag [#allocation5], 1
    %20 = vsyncpa %s19, 0
    loop: start=0, step=1, limit=8
    $region2: #{tpu_custom_call.1} parent=1 // loop_pre_header
      _
    $region3: #{tpu_custom_call.1} parent=1 // loop_header
      %s22 = sphi 0, %s26
      %p23 = scmp.ge.s32.totalorder %s22, 8
      %s29 = sphi 0, %s41
      %s30 = sphi 0, %s37
      %s31 = sphi 0, %s29
      %s32 = sphi 0, %s30
      %s33 = sphi 0, %s31
      %s34 = sphi 0, %s32
      %s44 = sphi 0, %s46
      %s47 = sphi 0, %s44
      %s48 = sphi 0, %s47
      %s64 = sphi 0, %s48
      %s70 = sphi 0, %s72
      %s73 = sphi 0, %s70
      %s74 = sphi 0, %s73
      %s90 = sphi 0, %s74
      %s96 = sphi 0, %s98
      %s99 = sphi 0, %s96
      %s100 = sphi 0, %s99
      %s116 = sphi 0, %s100
      %s122 = sphi 0, %s124
      %s125 = sphi 0, %s122
      %s126 = sphi 0, %s125
      %s142 = sphi 0, %s126
      %s150 = sphi 0, %s152
      %s153 = sphi 0, %s150
      %s154 = sphi 0, %s153
      %s170 = sphi 0, %s154
    $region4: #{tpu_custom_call.1} parent=1 // loop_header_branch
      %25 = sbr.rel (%p23) target = $region8
    $region5: #{tpu_custom_call.1} parent=1 // loop_body
      %s27 = ssub.s32 %s22, 1
      %s28 = ssub.s32 %s22, 2
      %s35 = sadd.s32 1, %s30
      %p36 = scmp.ge.s32.totalorder %s35, 3
      %s37 = scalar_select %p36, 0, %s35
      %s38 = sadd.s32 1, %s29
      %s39 = scalar_select %p36, %s38, %s29
      %p40 = scmp.ge.s32.totalorder %s39, 2
      %s41 = scalar_select %p40, 0, %s39
      %s42 = ssub.s32 %s29, %s41
      %p43 = scmp.eq.s32.totalorder %s42, 0
      %s45 = sadd.s32 %s44, 1
      %s46 = scalar_select %p43, %s44, %s45
      %p49 = pneg %p43
      %p50 = scmp.eq.s32.totalorder %s22, 5
      %p51 = por %p49, %p50
      %p52 = scmp.ne.s32.totalorder %s44, %s47
      %p53 = scmp.eq.s32.totalorder %s22, 0
      %p54 = por %p52, %p53
      %p55 = scmp.ne.s32.totalorder %s44, %s47
      %p56 = scmp.eq.s32.totalorder %s27, 5
      %p57 = por %p55, %p56
      %p58 = scmp.ne.s32.totalorder %s47, %s48
      %p59 = scmp.eq.s32.totalorder %s27, 0
      %p60 = por %p58, %p59
      %p61 = scmp.ne.s32.totalorder %s47, %s48
      %p62 = scmp.eq.s32.totalorder %s28, 5
      %p63 = por %p61, %p62
      %p65 = scmp.ne.s32.totalorder %s48, %s64
      %p66 = scmp.eq.s32.totalorder %s28, 0
      %p67 = por %p65, %p66
      %s68 = ssub.s32 %s30, %s37
      %p69 = scmp.eq.s32.totalorder %s68, 0
      %s71 = sadd.s32 %s70, 1
      %s72 = scalar_select %p69, %s70, %s71
      %p75 = pneg %p69
      %p76 = scmp.eq.s32.totalorder %s22, 5
      %p77 = por %p75, %p76
      %p78 = scmp.ne.s32.totalorder %s70, %s73
      %p79 = scmp.eq.s32.totalorder %s22, 0
      %p80 = por %p78, %p79
      %p81 = scmp.ne.s32.totalorder %s70, %s73
      %p82 = scmp.eq.s32.totalorder %s27, 5
      %p83 = por %p81, %p82
      %p84 = scmp.ne.s32.totalorder %s73, %s74
      %p85 = scmp.eq.s32.totalorder %s27, 0
      %p86 = por %p84, %p85
      %p87 = scmp.ne.s32.totalorder %s73, %s74
      %p88 = scmp.eq.s32.totalorder %s28, 5
      %p89 = por %p87, %p88
      %p91 = scmp.ne.s32.totalorder %s74, %s90
      %p92 = scmp.eq.s32.totalorder %s28, 0
      %p93 = por %p91, %p92
      %s94 = ssub.s32 %s30, %s37
      %p95 = scmp.eq.s32.totalorder %s94, 0
      %s97 = sadd.s32 %s96, 1
      %s98 = scalar_select %p95, %s96, %s97
      %p101 = pneg %p95
      %p102 = scmp.eq.s32.totalorder %s22, 5
      %p103 = por %p101, %p102
      %p104 = scmp.ne.s32.totalorder %s96, %s99
      %p105 = scmp.eq.s32.totalorder %s22, 0
      %p106 = por %p104, %p105
      %p107 = scmp.ne.s32.totalorder %s96, %s99
      %p108 = scmp.eq.s32.totalorder %s27, 5
      %p109 = por %p107, %p108
      %p110 = scmp.ne.s32.totalorder %s99, %s100
      %p111 = scmp.eq.s32.totalorder %s27, 0
      %p112 = por %p110, %p111
      %p113 = scmp.ne.s32.totalorder %s99, %s100
      %p114 = scmp.eq.s32.totalorder %s28, 5
      %p115 = por %p113, %p114
      %p117 = scmp.ne.s32.totalorder %s100, %s116
      %p118 = scmp.eq.s32.totalorder %s28, 0
      %p119 = por %p117, %p118
      %s120 = ssub.s32 %s30, %s37
      %p121 = scmp.eq.s32.totalorder %s120, 0
      %s123 = sadd.s32 %s122, 1
      %s124 = scalar_select %p121, %s122, %s123
      %p127 = pneg %p121
      %p128 = scmp.eq.s32.totalorder %s22, 5
      %p129 = por %p127, %p128
      %p130 = scmp.ne.s32.totalorder %s122, %s125
      %p131 = scmp.eq.s32.totalorder %s22, 0
      %p132 = por %p130, %p131
      %p133 = scmp.ne.s32.totalorder %s122, %s125
      %p134 = scmp.eq.s32.totalorder %s27, 5
      %p135 = por %p133, %p134
      %p136 = scmp.ne.s32.totalorder %s125, %s126
      %p137 = scmp.eq.s32.totalorder %s27, 0
      %p138 = por %p136, %p137
      %p139 = scmp.ne.s32.totalorder %s125, %s126
      %p140 = scmp.eq.s32.totalorder %s28, 5
      %p141 = por %p139, %p140
      %p143 = scmp.ne.s32.totalorder %s126, %s142
      %p144 = scmp.eq.s32.totalorder %s28, 0
      %p145 = por %p143, %p144
      %s146 = ssub.s32 %s29, %s41
      %s147 = ssub.s32 %s30, %s37
      %s148 = sor.u32 %s146, %s147
      %p149 = scmp.eq.s32.totalorder %s148, 0
      %s151 = sadd.s32 %s150, 1
      %s152 = scalar_select %p149, %s150, %s151
      %p155 = pneg %p149
      %p156 = scmp.eq.s32.totalorder %s22, 5
      %p157 = por %p155, %p156
      %p158 = scmp.ne.s32.totalorder %s150, %s153
      %p159 = scmp.eq.s32.totalorder %s22, 0
      %p160 = por %p158, %p159
      %p161 = scmp.ne.s32.totalorder %s150, %s153
      %p162 = scmp.eq.s32.totalorder %s27, 5
      %p163 = por %p161, %p162
      %p164 = scmp.ne.s32.totalorder %s153, %s154
      %p165 = scmp.eq.s32.totalorder %s27, 0
      %p166 = por %p164, %p165
      %p167 = scmp.ne.s32.totalorder %s153, %s154
      %p168 = scmp.eq.s32.totalorder %s28, 5
      %p169 = por %p167, %p168
      %p171 = scmp.ne.s32.totalorder %s154, %s170
      %p172 = scmp.eq.s32.totalorder %s28, 0
      %p173 = por %p171, %p172
      %p174 = scmp.le.s32.totalorder 1, %s22
      %p175 = scmp.lt.s32.totalorder %s22, 7
      %p176 = pnand %p174, %p175
      %p177 = pneg %p176
      // Predicated region
      $region9: #{tpu_custom_call.1} parent=5 // pred_check
        _
      $region10: #{tpu_custom_call.1} parent=5 // pred_check_branch
        %179 = sbr.rel (%p176) target = $region12
      $region11: #{tpu_custom_call.1} parent=5 // pred_region
        %s180 = ssub.s32 %s22, 1
      $region12: #{tpu_custom_call.1} parent=5 // pred_fallthru
        _
      %p181 = scmp.lt.s32.totalorder %s22, 6
      // Predicated region
      $region13: #{tpu_custom_call.1} parent=5 // pred_check
        %p182 = pneg %p181
      $region14: #{tpu_custom_call.1} parent=5 // pred_check_branch
        %184 = sbr.rel (%p182) target = $region16
      $region15: #{tpu_custom_call.1} parent=5 // pred_region
        // Predicated region
        $region17: #{tpu_custom_call.1} parent=15 // pred_check
          %p185 = pneg %p54
        $region18: #{tpu_custom_call.1} parent=15 // pred_check_branch
          %187 = sbr.rel (%p185) target = $region20
        $region19: #{tpu_custom_call.1} parent=15 // pred_region
          %s188 = sand.u32 %s44, 1
          %s189 = scalar_lea.sflag [#allocation4], %s188
          %s190 = sand.u32 %s44, 1
          %s191 = smul.addr %s190, 128
          %s192 = scalar_lea.vmem [#allocation3], %s191
          %s193 = smul.u32 16, %s29
          %195 = vsyncadd %s189, 0
          %s196 = smul.addr %s193, 8
          %s197 = scalar_lea.hbm %s0, %s196
          %s198 = sshll.u32 %s197, 4
          %s199 = int_to_ptr.hbm [resolvable:$true] %s198
          %s200 = sshll.u32 %s192, 4
          %s201 = int_to_ptr.vmem [resolvable:$true] %s200
          %206 = dma.hbm_to_vmem [thread:$0]  %s199, 2048, %s201, %s189, 128, 128, 8
        $region20: #{tpu_custom_call.1} parent=15 // pred_fallthru
          _
        // Predicated region
        $region21: #{tpu_custom_call.1} parent=15 // pred_check
          %p207 = pneg %p80
        $region22: #{tpu_custom_call.1} parent=15 // pred_check_branch
          %209 = sbr.rel (%p207) target = $region24
        $region23: #{tpu_custom_call.1} parent=15 // pred_region
          %s210 = sand.u32 %s22, 1
          %s211 = scalar_lea.sflag [#allocation7], %s210
          %s212 = sand.u32 %s70, 1
          %s213 = smul.addr %s212, 64
          %s214 = scalar_lea.vmem [#allocation6], %s213
          %216 = vsyncadd %s211, 0
          %s217 = smul.addr %s30, 4
          %s218 = scalar_lea.hbm %s1, %s217
          %s219 = sshll.u32 %s218, 4
          %s220 = int_to_ptr.hbm [resolvable:$true] %s219
          %s221 = sshll.u32 %s214, 4
          %s222 = int_to_ptr.vmem [resolvable:$true] %s221
          %227 = dma.hbm_to_vmem [thread:$0]  %s220, 1024, %s222, %s211, 192, 64, 4
        $region24: #{tpu_custom_call.1} parent=15 // pred_fallthru
          _
        // Predicated region
        $region25: #{tpu_custom_call.1} parent=15 // pred_check
          %p228 = pneg %p106
        $region26: #{tpu_custom_call.1} parent=15 // pred_check_branch
          %230 = sbr.rel (%p228) target = $region28
        $region27: #{tpu_custom_call.1} parent=15 // pred_region
          %s231 = sand.u32 %s22, 1
          %s232 = scalar_lea.sflag [#allocation7], %s231
          %s233 = sand.u32 %s96, 1
          %s234 = scalar_lea.vmem [#allocation8], %s233
          %236 = vsyncadd %s232, 0
          %s237 = scalar_lea.hbm %s2, %s30
          %s239 = sshll.u32 %s237, 4
          %s240 = int_to_ptr.hbm [resolvable:$true] %s239
          %s241 = sshll.u32 %s234, 4
          %s242 = int_to_ptr.vmem [resolvable:$true] %s241
          %244 = dma.hbm_to_vmem [thread:$0]  %s240, 16, %s242, %s232
        $region28: #{tpu_custom_call.1} parent=15 // pred_fallthru
          _
        // Predicated region
        $region29: #{tpu_custom_call.1} parent=15 // pred_check
          %p245 = pneg %p132
        $region30: #{tpu_custom_call.1} parent=15 // pred_check_branch
          %247 = sbr.rel (%p245) target = $region32
        $region31: #{tpu_custom_call.1} parent=15 // pred_region
          %s248 = sand.u32 %s122, 1
          %s249 = scalar_lea.sflag [#allocation10], %s248
          %s250 = sand.u32 %s122, 1
          %s251 = scalar_lea.vmem [#allocation9], %s250
          %253 = vsyncadd %s249, 0
          %s254 = scalar_lea.hbm %s3, %s30
          %s256 = sshll.u32 %s254, 4
          %s257 = int_to_ptr.hbm [resolvable:$true] %s256
          %s258 = sshll.u32 %s251, 4
          %s259 = int_to_ptr.vmem [resolvable:$true] %s258
          %261 = dma.hbm_to_vmem [thread:$0]  %s257, 16, %s259, %s249
        $region32: #{tpu_custom_call.1} parent=15 // pred_fallthru
          _
      $region16: #{tpu_custom_call.1} parent=5 // pred_fallthru
        _
      %p262 = scmp.le.s32.totalorder 1, %s22
      %p263 = scmp.lt.s32.totalorder %s22, 7
      %p264 = pnand %p262, %p263
      %p265 = pneg %p264
      // Predicated region
      $region33: #{tpu_custom_call.1} parent=5 // pred_check
        _
      $region34: #{tpu_custom_call.1} parent=5 // pred_check_branch
        %267 = sbr.rel (%p264) target = $region36
      $region35: #{tpu_custom_call.1} parent=5 // pred_region
        %s268 = ssub.s32 %s22, 1
        %s269 = sand.u32 %s47, 1
        %s270 = scalar_lea.sflag [#allocation4], %s269
        %s271 = sand.u32 %s47, 1
        %s272 = smul.addr %s271, 128
        %s273 = scalar_lea.vmem [#allocation3], %s272
        // Predicated region
        $region37: #{tpu_custom_call.1} parent=35 // pred_check
          %p274 = pneg %p60
        $region38: #{tpu_custom_call.1} parent=35 // pred_check_branch
          %276 = sbr.rel (%p274) target = $region40
        $region39: #{tpu_custom_call.1} parent=35 // pred_region
          %278 = dma.done %s270, 2048
        $region40: #{tpu_custom_call.1} parent=35 // pred_fallthru
          _
        %s279 = sand.u32 %s27, 1
        %s280 = scalar_lea.sflag [#allocation7], %s279
        %s281 = sand.u32 %s73, 1
        %s282 = smul.addr %s281, 64
        %s283 = scalar_lea.vmem [#allocation6], %s282
        // Predicated region
        $region41: #{tpu_custom_call.1} parent=35 // pred_check
          %p284 = pneg %p86
        $region42: #{tpu_custom_call.1} parent=35 // pred_check_branch
          %286 = sbr.rel (%p284) target = $region44
        $region43: #{tpu_custom_call.1} parent=35 // pred_region
          %288 = dma.done %s280, 1024
        $region44: #{tpu_custom_call.1} parent=35 // pred_fallthru
          _
        %s289 = sand.u32 %s27, 1
        %s290 = scalar_lea.sflag [#allocation7], %s289
        %s291 = sand.u32 %s99, 1
        %s292 = scalar_lea.vmem [#allocation8], %s291
        // Predicated region
        $region45: #{tpu_custom_call.1} parent=35 // pred_check
          %p293 = pneg %p112
        $region46: #{tpu_custom_call.1} parent=35 // pred_check_branch
          %295 = sbr.rel (%p293) target = $region48
        $region47: #{tpu_custom_call.1} parent=35 // pred_region
          %297 = dma.done %s290, 16
        $region48: #{tpu_custom_call.1} parent=35 // pred_fallthru
          _
        %s298 = sand.u32 %s125, 1
        %s299 = scalar_lea.sflag [#allocation10], %s298
        %s300 = sand.u32 %s125, 1
        %s301 = scalar_lea.vmem [#allocation9], %s300
        // Predicated region
        $region49: #{tpu_custom_call.1} parent=35 // pred_check
          %p302 = pneg %p138
        $region50: #{tpu_custom_call.1} parent=35 // pred_check_branch
          %304 = sbr.rel (%p302) target = $region52
        $region51: #{tpu_custom_call.1} parent=35 // pred_region
          %306 = dma.done %s299, 16
        $region52: #{tpu_custom_call.1} parent=35 // pred_fallthru
          _
        %s307 = sand.u32 %s47, 1
        %s308 = scalar_lea.sflag [#allocation4], %s307
        %s309 = sand.u32 %s47, 1
        %s310 = smul.addr %s309, 128
        %s311 = scalar_lea.vmem [#allocation3], %s310
        %p312 = pneg %p60
        %p313 = pneg %p57
        %s314 = sand.u32 %s27, 1
        %s315 = scalar_lea.sflag [#allocation7], %s314
        %s316 = sand.u32 %s73, 1
        %s317 = smul.addr %s316, 64
        %s318 = scalar_lea.vmem [#allocation6], %s317
        %p319 = pneg %p86
        %p320 = pneg %p83
        %s321 = sand.u32 %s27, 1
        %s322 = scalar_lea.sflag [#allocation7], %s321
        %s323 = sand.u32 %s99, 1
        %s324 = scalar_lea.vmem [#allocation8], %s323
        %p325 = pneg %p112
        %p326 = pneg %p109
        %s327 = sand.u32 %s125, 1
        %s328 = scalar_lea.sflag [#allocation10], %s327
        %s329 = sand.u32 %s125, 1
        %s330 = scalar_lea.vmem [#allocation9], %s329
        %p331 = pneg %p138
        %p332 = pneg %p135
        %p333 = pneg %p166
        %p334 = pneg %p163
        %s335 = sand.u32 %s153, 1
        %s336 = scalar_lea.sflag [#allocation5], %s335
        %s337 = sand.u32 %s153, 1
        %s338 = smul.addr %s337, 128
        %s339 = scalar_lea.vmem [#allocation11], %s338
        %s340 = smul.u32 16, %s31
        %s341 = smul.u32 16, %s31
        %p342 = scmp.eq.s32.totalorder %s32, 0
        // Predicated region
        $region53: #{tpu_custom_call.1} parent=35 // pred_check
          %p343 = pneg %p342
        $region54: #{tpu_custom_call.1} parent=35 // pred_check_branch
          %345 = sbr.rel (%p343) target = $region56
        $region55: #{tpu_custom_call.1} parent=35 // pred_region
          %v346 = vld [vmem:[%s273] sm:$0xff]
          %v347 = vld [vmem:[%s273 + $0x8] sm:$0xff]
          %v348 = vld [vmem:[%s273 + $0x10] sm:$0xff]
          %v349 = vld [vmem:[%s273 + $0x18] sm:$0xff]
          %v350 = vld [vmem:[%s273 + $0x20] sm:$0xff]
          %v351 = vld [vmem:[%s273 + $0x28] sm:$0xff]
          %v352 = vld [vmem:[%s273 + $0x30] sm:$0xff]
          %v353 = vld [vmem:[%s273 + $0x38] sm:$0xff]
          %v354 = vld [vmem:[%s273 + $0x40] sm:$0xff]
          %v355 = vld [vmem:[%s273 + $0x48] sm:$0xff]
          %v356 = vld [vmem:[%s273 + $0x50] sm:$0xff]
          %v357 = vld [vmem:[%s273 + $0x58] sm:$0xff]
          %v358 = vld [vmem:[%s273 + $0x60] sm:$0xff]
          %v359 = vld [vmem:[%s273 + $0x68] sm:$0xff]
          %v360 = vld [vmem:[%s273 + $0x70] sm:$0xff]
          %v361 = vld [vmem:[%s273 + $0x78] sm:$0xff]
          %v362 = vadd.f32 %v346, 1.0
          %v363 = vadd.f32 %v347, 1.0
          %v364 = vadd.f32 %v348, 1.0
          %v365 = vadd.f32 %v349, 1.0
          %v366 = vadd.f32 %v350, 1.0
          %v367 = vadd.f32 %v351, 1.0
          %v368 = vadd.f32 %v352, 1.0
          %v369 = vadd.f32 %v353, 1.0
          %v370 = vadd.f32 %v354, 1.0
          %v371 = vadd.f32 %v355, 1.0
          %v372 = vadd.f32 %v356, 1.0
          %v373 = vadd.f32 %v357, 1.0
          %v374 = vadd.f32 %v358, 1.0
          %v375 = vadd.f32 %v359, 1.0
          %v376 = vadd.f32 %v360, 1.0
          %v377 = vadd.f32 %v361, 1.0
          %v378 = vlog2.pop %v362
          %v379 = vmul.f32 %v378, 0.6931472
          %v380 = vlog2.pop %v363
          %v381 = vmul.f32 %v380, 0.6931472
          %v382 = vlog2.pop %v364
          %v383 = vmul.f32 %v382, 0.6931472
          %v384 = vlog2.pop %v365
          %v385 = vmul.f32 %v384, 0.6931472
          %v386 = vlog2.pop %v366
          %v387 = vmul.f32 %v386, 0.6931472
          %v388 = vlog2.pop %v367
          %v389 = vmul.f32 %v388, 0.6931472
          %v390 = vlog2.pop %v368
          %v391 = vmul.f32 %v390, 0.6931472
          %v392 = vlog2.pop %v369
          %v393 = vmul.f32 %v392, 0.6931472
          %v394 = vlog2.pop %v370
          %v395 = vmul.f32 %v394, 0.6931472
          %v396 = vlog2.pop %v371
          %v397 = vmul.f32 %v396, 0.6931472
          %v398 = vlog2.pop %v372
          %v399 = vmul.f32 %v398, 0.6931472
          %v400 = vlog2.pop %v373
          %v401 = vmul.f32 %v400, 0.6931472
          %v402 = vlog2.pop %v374
          %v403 = vmul.f32 %v402, 0.6931472
          %v404 = vlog2.pop %v375
          %v405 = vmul.f32 %v404, 0.6931472
          %v406 = vlog2.pop %v376
          %v407 = vmul.f32 %v406, 0.6931472
          %v408 = vlog2.pop %v377
          %v409 = vmul.f32 %v408, 0.6931472
          %v410 = vpack.c.bf16 %v379, %v379
          %v411 = vpack.c.bf16 %v381, %v381
          %v412 = vpack.c.bf16 %v383, %v383
          %v413 = vpack.c.bf16 %v385, %v385
          %v414 = vpack.c.bf16 %v387, %v387
          %v415 = vpack.c.bf16 %v389, %v389
          %v416 = vpack.c.bf16 %v391, %v391
          %v417 = vpack.c.bf16 %v393, %v393
          %v418 = vpack.c.bf16 %v395, %v395
          %v419 = vpack.c.bf16 %v397, %v397
          %v420 = vpack.c.bf16 %v399, %v399
          %v421 = vpack.c.bf16 %v401, %v401
          %v422 = vpack.c.bf16 %v403, %v403
          %v423 = vpack.c.bf16 %v405, %v405
          %v424 = vpack.c.bf16 %v407, %v407
          %v425 = vpack.c.bf16 %v409, %v409
          %426 = vst [vmem:[#allocation2] sm:$0xf] %v410
          %427 = vst [vmem:[#allocation2 + $0x4] sm:$0xf] %v411
          %428 = vst [vmem:[#allocation2 + $0x8] sm:$0xf] %v412
          %429 = vst [vmem:[#allocation2 + $0xc] sm:$0xf] %v413
          %430 = vst [vmem:[#allocation2 + $0x10] sm:$0xf] %v414
          %431 = vst [vmem:[#allocation2 + $0x14] sm:$0xf] %v415
          %432 = vst [vmem:[#allocation2 + $0x18] sm:$0xf] %v416
          %433 = vst [vmem:[#allocation2 + $0x1c] sm:$0xf] %v417
          %434 = vst [vmem:[#allocation2 + $0x20] sm:$0xf] %v418
          %435 = vst [vmem:[#allocation2 + $0x24] sm:$0xf] %v419
          %436 = vst [vmem:[#allocation2 + $0x28] sm:$0xf] %v420
          %437 = vst [vmem:[#allocation2 + $0x2c] sm:$0xf] %v421
          %438 = vst [vmem:[#allocation2 + $0x30] sm:$0xf] %v422
          %439 = vst [vmem:[#allocation2 + $0x34] sm:$0xf] %v423
          %440 = vst [vmem:[#allocation2 + $0x38] sm:$0xf] %v424
          %441 = vst [vmem:[#allocation2 + $0x3c] sm:$0xf] %v425
        $region56: #{tpu_custom_call.1} parent=35 // pred_fallthru
          _
        %v442 = vld [vmem:[#allocation2] sm:$0xf]
        %v443 = vld [vmem:[#allocation2 + $0x4] sm:$0xf]
        %v444 = vld [vmem:[#allocation2 + $0x8] sm:$0xf]
        %v445 = vld [vmem:[#allocation2 + $0xc] sm:$0xf]
        %v446 = vld [vmem:[#allocation2 + $0x10] sm:$0xf]
        %v447 = vld [vmem:[#allocation2 + $0x14] sm:$0xf]
        %v448 = vld [vmem:[#allocation2 + $0x18] sm:$0xf]
        %v449 = vld [vmem:[#allocation2 + $0x1c] sm:$0xf]
        %v450 = vld [vmem:[#allocation2 + $0x20] sm:$0xf]
        %v451 = vld [vmem:[#allocation2 + $0x24] sm:$0xf]
        %v452 = vld [vmem:[#allocation2 + $0x28] sm:$0xf]
        %v453 = vld [vmem:[#allocation2 + $0x2c] sm:$0xf]
        %v454 = vld [vmem:[#allocation2 + $0x30] sm:$0xf]
        %v455 = vld [vmem:[#allocation2 + $0x34] sm:$0xf]
        %v456 = vld [vmem:[#allocation2 + $0x38] sm:$0xf]
        %v457 = vld [vmem:[#allocation2 + $0x3c] sm:$0xf]
        %v458 = vld [vmem:[%s283] sm:$0xf]
        %v459 = vld [vmem:[%s283 + $0x4] sm:$0xf]
        %v460 = vld [vmem:[%s283 + $0x8] sm:$0xf]
        %v461 = vld [vmem:[%s283 + $0xc] sm:$0xf]
        %v462 = vld [vmem:[%s283 + $0x10] sm:$0xf]
        %v463 = vld [vmem:[%s283 + $0x14] sm:$0xf]
        %v464 = vld [vmem:[%s283 + $0x18] sm:$0xf]
        %v465 = vld [vmem:[%s283 + $0x1c] sm:$0xf]
        %v466 = vld [vmem:[%s283 + $0x20] sm:$0xf]
        %v467 = vld [vmem:[%s283 + $0x24] sm:$0xf]
        %v468 = vld [vmem:[%s283 + $0x28] sm:$0xf]
        %v469 = vld [vmem:[%s283 + $0x2c] sm:$0xf]
        %v470 = vld [vmem:[%s283 + $0x30] sm:$0xf]
        %v471 = vld [vmem:[%s283 + $0x34] sm:$0xf]
        %v472 = vld [vmem:[%s283 + $0x38] sm:$0xf]
        %v473 = vld [vmem:[%s283 + $0x3c] sm:$0xf]
        %v490 = vunpack.c.l.b16 %v442
        %v491 = vunpack.c.l.b16 %v443
        %v492 = vunpack.c.l.b16 %v444
        %v493 = vunpack.c.l.b16 %v445
        %v494 = vunpack.c.l.b16 %v446
        %v495 = vunpack.c.l.b16 %v447
        %v496 = vunpack.c.l.b16 %v448
        %v497 = vunpack.c.l.b16 %v449
        %v498 = vunpack.c.l.b16 %v450
        %v499 = vunpack.c.l.b16 %v451
        %v500 = vunpack.c.l.b16 %v452
        %v501 = vunpack.c.l.b16 %v453
        %v502 = vunpack.c.l.b16 %v454
        %v503 = vunpack.c.l.b16 %v455
        %v504 = vunpack.c.l.b16 %v456
        %v505 = vunpack.c.l.b16 %v457
        %v506 = vpack.c.b16 %v491, %v490
        %v507 = vpack.c.b16 %v493, %v492
        %v508 = vpack.c.b16 %v495, %v494
        %v509 = vpack.c.b16 %v497, %v496
        %v510 = vpack.c.b16 %v499, %v498
        %v511 = vpack.c.b16 %v501, %v500
        %v512 = vpack.c.b16 %v503, %v502
        %v513 = vpack.c.b16 %v505, %v504
        %v538 = vunpack.c.l.b16 %v458
        %v539 = vunpack.c.l.b16 %v459
        %v540 = vunpack.c.l.b16 %v460
        %v541 = vunpack.c.l.b16 %v461
        %v542 = vunpack.c.l.b16 %v462
        %v543 = vunpack.c.l.b16 %v463
        %v544 = vunpack.c.l.b16 %v464
        %v545 = vunpack.c.l.b16 %v465
        %v546 = vunpack.c.l.b16 %v466
        %v547 = vunpack.c.l.b16 %v467
        %v548 = vunpack.c.l.b16 %v468
        %v549 = vunpack.c.l.b16 %v469
        %v550 = vunpack.c.l.b16 %v470
        %v551 = vunpack.c.l.b16 %v471
        %v552 = vunpack.c.l.b16 %v472
        %v553 = vunpack.c.l.b16 %v473
        %v554 = vpack.c.b16 %v539, %v538
        %v555 = vpack.c.b16 %v541, %v540
        %v556 = vpack.c.b16 %v543, %v542
        %v557 = vpack.c.b16 %v545, %v544
        %v558 = vpack.c.b16 %v547, %v546
        %v559 = vpack.c.b16 %v549, %v548
        %v560 = vpack.c.b16 %v551, %v550
        %v561 = vpack.c.b16 %v553, %v552
        %570 = vmatpush.bf16.msra.mxu0 %v561
        %571 = vmatpush.bf16.msra.mxu0 %v560
        %572 = vmatpush.bf16.msra.mxu0 %v559
        %573 = vmatpush.bf16.msra.mxu0 %v558
        %574 = vmatpush.bf16.msra.mxu0 %v557
        %575 = vmatpush.bf16.msra.mxu0 %v556
        %576 = vmatpush.bf16.msra.mxu0 %v555
        %577 = vmatpush.bf16.msra.mxu0 %v554
        %578 = vmatmul.bf16.gmra.mxu0 %v506
        %v579 = vpop.f32.mrf.mxu0
        %v580 = vadd.f32 0.0, %v579
        %v581 = vpop.f32.mrf.mxu0
        %v582 = vadd.f32 0.0, %v581
        %583 = vmatmul.bf16.gmra.mxu0 %v507
        %v584 = vpop.f32.mrf.mxu0
        %v585 = vadd.f32 0.0, %v584
        %v586 = vpop.f32.mrf.mxu0
        %v587 = vadd.f32 0.0, %v586
        %588 = vmatmul.bf16.gmra.mxu0 %v508
        %v589 = vpop.f32.mrf.mxu0
        %v590 = vadd.f32 0.0, %v589
        %v591 = vpop.f32.mrf.mxu0
        %v592 = vadd.f32 0.0, %v591
        %593 = vmatmul.bf16.gmra.mxu0 %v509
        %v594 = vpop.f32.mrf.mxu0
        %v595 = vadd.f32 0.0, %v594
        %v596 = vpop.f32.mrf.mxu0
        %v597 = vadd.f32 0.0, %v596
        %598 = vmatmul.bf16.gmra.mxu0 %v510
        %v599 = vpop.f32.mrf.mxu0
        %v600 = vadd.f32 0.0, %v599
        %v601 = vpop.f32.mrf.mxu0
        %v602 = vadd.f32 0.0, %v601
        %603 = vmatmul.bf16.gmra.mxu0 %v511
        %v604 = vpop.f32.mrf.mxu0
        %v605 = vadd.f32 0.0, %v604
        %v606 = vpop.f32.mrf.mxu0
        %v607 = vadd.f32 0.0, %v606
        %608 = vmatmul.bf16.gmra.mxu0 %v512
        %v609 = vpop.f32.mrf.mxu0
        %v610 = vadd.f32 0.0, %v609
        %v611 = vpop.f32.mrf.mxu0
        %v612 = vadd.f32 0.0, %v611
        %613 = vmatmul.bf16.gmra.mxu0 %v513
        %v614 = vpop.f32.mrf.mxu0
        %v615 = vadd.f32 0.0, %v614
        %v616 = vpop.f32.mrf.mxu0
        %v617 = vadd.f32 0.0, %v616
        %618 = vdwg.mxu0
        %v619 = vld [vmem:[%s292] sm:$0x1]
        %v621 = vperm.slane %v619, 0
        %v623 = vmul.f32 %v580, %v621
        %v624 = vmul.f32 %v582, %v621
        %v625 = vmul.f32 %v585, %v621
        %v626 = vmul.f32 %v587, %v621
        %v627 = vmul.f32 %v590, %v621
        %v628 = vmul.f32 %v592, %v621
        %v629 = vmul.f32 %v595, %v621
        %v630 = vmul.f32 %v597, %v621
        %v631 = vmul.f32 %v600, %v621
        %v632 = vmul.f32 %v602, %v621
        %v633 = vmul.f32 %v605, %v621
        %v634 = vmul.f32 %v607, %v621
        %v635 = vmul.f32 %v610, %v621
        %v636 = vmul.f32 %v612, %v621
        %v637 = vmul.f32 %v615, %v621
        %v638 = vmul.f32 %v617, %v621
        %v639 = vld [vmem:[%s301] sm:$0x1]
        %v641 = vperm.slane %v639, 0
        %v643 = vadd.f32 %v623, %v641
        %v644 = vadd.f32 %v624, %v641
        %v645 = vadd.f32 %v625, %v641
        %v646 = vadd.f32 %v626, %v641
        %v647 = vadd.f32 %v627, %v641
        %v648 = vadd.f32 %v628, %v641
        %v649 = vadd.f32 %v629, %v641
        %v650 = vadd.f32 %v630, %v641
        %v651 = vadd.f32 %v631, %v641
        %v652 = vadd.f32 %v632, %v641
        %v653 = vadd.f32 %v633, %v641
        %v654 = vadd.f32 %v634, %v641
        %v655 = vadd.f32 %v635, %v641
        %v656 = vadd.f32 %v636, %v641
        %v657 = vadd.f32 %v637, %v641
        %v658 = vadd.f32 %v638, %v641
        %v659 = vmul.f32 %v643, 1.442695
        %v660 = vpow.pop %v659
        %v661 = vmul.f32 %v644, 1.442695
        %v662 = vpow.pop %v661
        %v663 = vmul.f32 %v645, 1.442695
        %v664 = vpow.pop %v663
        %v665 = vmul.f32 %v646, 1.442695
        %v666 = vpow.pop %v665
        %v667 = vmul.f32 %v647, 1.442695
        %v668 = vpow.pop %v667
        %v669 = vmul.f32 %v648, 1.442695
        %v670 = vpow.pop %v669
        %v671 = vmul.f32 %v649, 1.442695
        %v672 = vpow.pop %v671
        %v673 = vmul.f32 %v650, 1.442695
        %v674 = vpow.pop %v673
        %v675 = vmul.f32 %v651, 1.442695
        %v676 = vpow.pop %v675
        %v677 = vmul.f32 %v652, 1.442695
        %v678 = vpow.pop %v677
        %v679 = vmul.f32 %v653, 1.442695
        %v680 = vpow.pop %v679
        %v681 = vmul.f32 %v654, 1.442695
        %v682 = vpow.pop %v681
        %v683 = vmul.f32 %v655, 1.442695
        %v684 = vpow.pop %v683
        %v685 = vmul.f32 %v656, 1.442695
        %v686 = vpow.pop %v685
        %v687 = vmul.f32 %v657, 1.442695
        %v688 = vpow.pop %v687
        %v689 = vmul.f32 %v658, 1.442695
        %v690 = vpow.pop %v689
        %691 = vst [vmem:[%s339] sm:$0xff] %v660
        %692 = vst [vmem:[%s339 + $0x8] sm:$0xff] %v662
        %693 = vst [vmem:[%s339 + $0x10] sm:$0xff] %v664
        %694 = vst [vmem:[%s339 + $0x18] sm:$0xff] %v666
        %695 = vst [vmem:[%s339 + $0x20] sm:$0xff] %v668
        %696 = vst [vmem:[%s339 + $0x28] sm:$0xff] %v670
        %697 = vst [vmem:[%s339 + $0x30] sm:$0xff] %v672
        %698 = vst [vmem:[%s339 + $0x38] sm:$0xff] %v674
        %699 = vst [vmem:[%s339 + $0x40] sm:$0xff] %v676
        %700 = vst [vmem:[%s339 + $0x48] sm:$0xff] %v678
        %701 = vst [vmem:[%s339 + $0x50] sm:$0xff] %v680
        %702 = vst [vmem:[%s339 + $0x58] sm:$0xff] %v682
        %703 = vst [vmem:[%s339 + $0x60] sm:$0xff] %v684
        %704 = vst [vmem:[%s339 + $0x68] sm:$0xff] %v686
        %705 = vst [vmem:[%s339 + $0x70] sm:$0xff] %v688
        %706 = vst [vmem:[%s339 + $0x78] sm:$0xff] %v690
        %s707 = sand.u32 %s153, 1
        %s708 = scalar_lea.sflag [#allocation5], %s707
        %s709 = sand.u32 %s153, 1
        %s710 = smul.addr %s709, 128
        %s711 = scalar_lea.vmem [#allocation11], %s710
        // Predicated region
        $region57: #{tpu_custom_call.1} parent=35 // pred_check
          %p712 = pneg %p163
        $region58: #{tpu_custom_call.1} parent=35 // pred_check_branch
          %714 = sbr.rel (%p712) target = $region60
        $region59: #{tpu_custom_call.1} parent=35 // pred_region
          %s715 = smul.u32 16, %s31
          %717 = vsyncadd %s708, 0
          %s718 = smul.addr %s715, 3
          %s719 = sadd.s32 %s32, %s718
          %s720 = smul.addr %s719, 8
          %s721 = scalar_lea.hbm %s4, %s720
          %s722 = sshll.u32 %s711, 4
          %s723 = int_to_ptr.vmem [resolvable:$true] %s722
          %s724 = sshll.u32 %s721, 4
          %s725 = int_to_ptr.hbm [resolvable:$true] %s724
          %730 = dma.vmem_to_hbm [thread:$0]  %s723, 2048, %s725, %s708, 128, 384, 8
        $region60: #{tpu_custom_call.1} parent=35 // pred_fallthru
          _
      $region36: #{tpu_custom_call.1} parent=5 // pred_fallthru
        _
      %p731 = scmp.le.s32.totalorder 2, %s22
      // Predicated region
      $region61: #{tpu_custom_call.1} parent=5 // pred_check
        %p732 = pneg %p731
      $region62: #{tpu_custom_call.1} parent=5 // pred_check_branch
        %734 = sbr.rel (%p732) target = $region64
      $region63: #{tpu_custom_call.1} parent=5 // pred_region
        %s735 = ssub.s32 %s22, 2
        // Predicated region
        $region65: #{tpu_custom_call.1} parent=63 // pred_check
          %p736 = pneg %p169
        $region66: #{tpu_custom_call.1} parent=63 // pred_check_branch
          %738 = sbr.rel (%p736) target = $region68
        $region67: #{tpu_custom_call.1} parent=63 // pred_region
          %s739 = sand.u32 %s154, 1
          %s740 = scalar_lea.sflag [#allocation5], %s739
          %s741 = sand.u32 %s154, 1
          %s742 = smul.addr %s741, 128
          %s743 = scalar_lea.vmem [#allocation11], %s742
          %745 = dma.done %s740, 2048
        $region68: #{tpu_custom_call.1} parent=63 // pred_fallthru
          _
      $region64: #{tpu_custom_call.1} parent=5 // pred_fallthru
        _
    $region6: #{tpu_custom_call.1} parent=1 // loop_footer
      %s26 = sadd.s32 1, %s22
    $region7: #{tpu_custom_call.1} parent=1 // loop_footer_branch
      %21 = sbr.rel target = $region3
    $region8: #{tpu_custom_call.1} parent=1 // loop_exit
      _
    %746 = vsyncpa [#allocation4], 1
    %s747 = scalar_lea.sflag [#allocation4], 1
    %748 = vsyncpa %s747, 1
    %749 = vsyncpa [#allocation7], 1
    %s750 = scalar_lea.sflag [#allocation7], 1
    %751 = vsyncpa %s750, 1
    %752 = vsyncpa [#allocation10], 1
    %s753 = scalar_lea.sflag [#allocation10], 1
    %754 = vsyncpa %s753, 1
    %755 = vsyncpa [#allocation5], 1
    %s756 = scalar_lea.sflag [#allocation5], 1
    %757 = vsyncpa %s756, 1

</llo_original>
